<compile_context>
chip_gen: v5e
topology: v5e:2x2
jax: 0.10.0
libtpu: 0.0.40
codegen_flags: <defaults>
</compile_context>

<pallas_src>
import functools

import jax
import jax.numpy as jnp
from jax.experimental import pallas as pl
from jax.experimental.pallas import tpu as pltpu

_LANE = 128  # vreg lane width


def _mlp_fused_kernel(xT_ref, *refs, n_layers):
    """Fused MLP body in feature-major (batch-on-lanes) layout.

    refs = (w1_ref, b1_ref, ..., wN_ref, bN_ref, oT_ref)
      xT_ref : (Din, TB)     -- batch on the 128-lane axis
      w_ref  : (dout, din)   -- PyTorch nn.Linear weight layout
      b_ref  : (dout, 1)     -- broadcast along lanes
      oT_ref : (Dout, TB)
    Hidden layers: Linear + Tanh.  Last layer: Linear only (no activation).
    Dropout(p=0.0) is the identity -> nothing to compute.
    """
    oT_ref = refs[-1]
    wb = refs[:-1]
    h = xT_ref[...]
    for i in range(n_layers):
        w_ref = wb[2 * i]
        b_ref = wb[2 * i + 1]
        # h^T <- W @ h^T + b : MXU matmul with f32 accumulation; the large
        # batch dim sits on the MXU N axis / vreg lanes (lane-dense).
        h = jnp.dot(w_ref[...], h, preferred_element_type=jnp.float32) + b_ref[...]
        if i < n_layers - 1:
            h = jnp.tanh(h)  # EUP; last layer has NO activation (last_na).
    oT_ref[...] = h.astype(oT_ref.dtype)


def init_mlp_params(key, net_dims):
    """PyTorch-style init: U(-1/sqrt(fan_in), 1/sqrt(fan_in)).

    Weights stored as (out, in) (nn.Linear layout, used directly by the
    feature-major kernel); biases stored as (out, 1).
    """
    params = []
    for i in range(len(net_dims) - 1):
        fan_in, fan_out = net_dims[i], net_dims[i + 1]
        key, kw, kb = jax.random.split(key, 3)
        bound = 1.0 / (fan_in ** 0.5)
        w = jax.random.uniform(kw, (fan_out, fan_in), jnp.float32, -bound, bound)
        b = jax.random.uniform(kb, (fan_out, 1), jnp.float32, -bound, bound)
        params.append((w, b))
    return params


def _choose_tile(B, tb_max):
    """Pick a lane-aligned batch tile.

    * B <  2*128        : single block, block dims == array dims (no alignment
                          requirement).
    * 2*128 <= B <= cap : split into >=2 lane-aligned blocks so the "parallel"
                          batch axis feeds both v7x TensorCores.
    * B > cap           : TB = cap (multiple of 128), grid >= 2 automatically.
    """
    if B < 2 * _LANE:
        return B
    if B <= tb_max:
        tb = -(-(-(-B // 2)) // _LANE) * _LANE  # round_up(ceil(B/2), 128)
        return min(tb, tb_max)
    return tb_max


def nn_mlp_last_na_forward(params, x, *, tb_max=2048):
    """Forward pass matching nn_mlp_last_na.forward, fused into one pallas_call.

    hidden layers: (dropout p=0 -> identity), Linear, Tanh
    last layer:    Linear only (no activation)
    """
    B, Din = x.shape
    n_layers = len(params)
    dims = [Din] + [w.shape[0] for w, _ in params]
    Dout = dims[-1]

    tb_max = max(_LANE, (int(tb_max) // _LANE) * _LANE)
    TB = _choose_tile(B, tb_max)
    grid = (pl.cdiv(B, TB),)

    # Layout plumbing: put the batch on the lane (last) axis.  No pad / slice:
    # the partial last block's OOB columns are read as garbage but never
    # written back (Pallas masks out-of-bounds stores), and columns are
    # independent through the whole MLP.
    xT = x.T  # (Din, B)

    # x^T is tiled over the batch grid; every weight/bias uses a constant
    # index_map so Pallas DMAs it once and keeps it VMEM-resident across steps.
    in_specs = [pl.BlockSpec((Din, TB), lambda i: (0, i))]
    args = [xT]
    for (w, b) in params:
        dout, din = w.shape
        in_specs.append(pl.BlockSpec((dout, din), lambda i: (0, 0)))
        in_specs.append(pl.BlockSpec((dout, 1), lambda i: (0, 0)))
        args.append(w)
        args.append(b)

    # Advisory cost estimate for XLA's scheduler.
    flops = 2 * B * sum(d0 * d1 for d0, d1 in zip(dims[:-1], dims[1:]))
    transcendentals = B * sum(dims[1:-1])  # one tanh per hidden unit
    bytes_accessed = 4 * (B * Din + sum(w.size + b.size for w, b in params) + B * Dout)

    outT = pl.pallas_call(
        functools.partial(_mlp_fused_kernel, n_layers=n_layers),
        out_shape=jax.ShapeDtypeStruct((Dout, B), x.dtype),
        grid=grid,
        in_specs=in_specs,
        out_specs=pl.BlockSpec((Dout, TB), lambda i: (0, i)),
        compiler_params=pltpu.CompilerParams(
            dimension_semantics=("parallel",),
            # Covers v5e's 16 MiB scoped default if tb_max is raised; actual
            # footprint at TB=2048 f32 is only a few MiB.
            vmem_limit_bytes=32 * 1024 * 1024),
        cost_estimate=pl.CostEstimate(
            flops=flops,
            transcendentals=transcendentals,
            bytes_accessed=bytes_accessed),
    )(*args)

    return outT.T  # (B, Dout)


def _reference_forward(params, x):
    out = x
    for i, (w, b) in enumerate(params):
        out = out @ w.T + b[:, 0]
        if i < len(params) - 1:
            out = jnp.tanh(out)
    return out


if __name__ == "__main__":
    net_dims = [32, 64, 48, 16]  # 32->64 (Tanh), 64->48 (Tanh), 48->16 (no act)
    batch = 8

    key = jax.random.PRNGKey(0)
    key, kx = jax.random.split(key)
    x = jax.random.normal(kx, (batch, net_dims[0]), jnp.float32)

    params = init_mlp_params(key, net_dims)

    # Small-batch path: single fused block (block dims == array dims).
    out = jax.block_until_ready(nn_mlp_last_na_forward(params, x))
    ref = _reference_forward(params, x)
    assert out.shape == (batch, net_dims[-1])
    assert jnp.allclose(out, ref, atol=1e-5, rtol=1e-5), "mismatch (small batch)"

    # Gridded path: multiple lane-aligned tiles + a partial last block
    # (1000 = 3*256 + 232), no wrapper pad/slice.
    key, kx2 = jax.random.split(key)
    x_big = jax.random.normal(kx2, (1000, net_dims[0]), jnp.float32)
    out_big = jax.block_until_ready(nn_mlp_last_na_forward(params, x_big, tb_max=256))
    ref_big = _reference_forward(params, x_big)
    assert out_big.shape == (1000, net_dims[-1])
    assert jnp.allclose(out_big, ref_big, atol=1e-5, rtol=1e-5), "mismatch (gridded)"

    print("KERNEL_OK")
</pallas_src>

<mosaic_0001>
module attributes {stable_mosaic.version = 11 : i64} {
  func.func @_mlp_fused_kernel(%arg0: i32, %arg1: memref<32x8xf32, #tpu.memory_space<vmem>>, %arg2: memref<64x32xf32, #tpu.memory_space<vmem>>, %arg3: memref<64x1xf32, #tpu.memory_space<vmem>>, %arg4: memref<48x64xf32, #tpu.memory_space<vmem>>, %arg5: memref<48x1xf32, #tpu.memory_space<vmem>>, %arg6: memref<16x48xf32, #tpu.memory_space<vmem>>, %arg7: memref<16x1xf32, #tpu.memory_space<vmem>>, %arg8: memref<16x8xf32, #tpu.memory_space<vmem>>) attributes {dimension_semantics = [#tpu.dimension_semantics<parallel>], iteration_bounds = array<i64: 1>, scalar_prefetch = 0 : i64, scratch_operands = 0 : i64, tpu.core_type = #tpu.core_type<tc>, window_params = [{transform_indices = @transform_0, window_bounds = array<i64: 32, 8>}, {pipeline_mode = #tpu.pipeline_mode<synchronous>, transform_indices = @transform_1, window_bounds = array<i64: 64, 32>}, {pipeline_mode = #tpu.pipeline_mode<synchronous>, transform_indices = @transform_2, window_bounds = array<i64: 64, 1>}, {pipeline_mode = #tpu.pipeline_mode<synchronous>, transform_indices = @transform_3, window_bounds = array<i64: 48, 64>}, {pipeline_mode = #tpu.pipeline_mode<synchronous>, transform_indices = @transform_4, window_bounds = array<i64: 48, 1>}, {pipeline_mode = #tpu.pipeline_mode<synchronous>, transform_indices = @transform_5, window_bounds = array<i64: 16, 48>}, {pipeline_mode = #tpu.pipeline_mode<synchronous>, transform_indices = @transform_6, window_bounds = array<i64: 16, 1>}, {transform_indices = @transform_7, window_bounds = array<i64: 16, 8>}]} {
    %c0 = arith.constant 0 : index
    %c0_0 = arith.constant 0 : index
    %0 = vector.load %arg1[%c0, %c0_0] : memref<32x8xf32, #tpu.memory_space<vmem>>, vector<32x8xf32>
    %c0_1 = arith.constant 0 : index
    %c0_2 = arith.constant 0 : index
    %1 = vector.load %arg2[%c0_1, %c0_2] : memref<64x32xf32, #tpu.memory_space<vmem>>, vector<64x32xf32>
    %cst = arith.constant dense<0.000000e+00> : vector<64x8xf32>
    %2 = tpu.matmul %1, %0, %cst {dimension_numbers = #tpu.dot_dimension_numbers<[1], [0], [0], [1], [0, 0, 1, 1], [], []>} : vector<64x32xf32>, vector<32x8xf32>, vector<64x8xf32> -> vector<64x8xf32>
    %c0_3 = arith.constant 0 : index
    %c0_4 = arith.constant 0 : index
    %3 = vector.load %arg3[%c0_3, %c0_4] : memref<64x1xf32, #tpu.memory_space<vmem>>, vector<64x1xf32>
    %4 = vector.broadcast %3 : vector<64x1xf32> to vector<64x8xf32>
    %5 = arith.addf %2, %4 : vector<64x8xf32>
    %6 = math.tanh %5 : vector<64x8xf32>
    %c0_5 = arith.constant 0 : index
    %c0_6 = arith.constant 0 : index
    %7 = vector.load %arg4[%c0_5, %c0_6] : memref<48x64xf32, #tpu.memory_space<vmem>>, vector<48x64xf32>
    %cst_7 = arith.constant dense<0.000000e+00> : vector<48x8xf32>
    %8 = tpu.matmul %7, %6, %cst_7 {dimension_numbers = #tpu.dot_dimension_numbers<[1], [0], [0], [1], [0, 0, 1, 1], [], []>} : vector<48x64xf32>, vector<64x8xf32>, vector<48x8xf32> -> vector<48x8xf32>
    %c0_8 = arith.constant 0 : index
    %c0_9 = arith.constant 0 : index
    %9 = vector.load %arg5[%c0_8, %c0_9] : memref<48x1xf32, #tpu.memory_space<vmem>>, vector<48x1xf32>
    %10 = vector.broadcast %9 : vector<48x1xf32> to vector<48x8xf32>
    %11 = arith.addf %8, %10 : vector<48x8xf32>
    %12 = math.tanh %11 : vector<48x8xf32>
    %c0_10 = arith.constant 0 : index
    %c0_11 = arith.constant 0 : index
    %13 = vector.load %arg6[%c0_10, %c0_11] : memref<16x48xf32, #tpu.memory_space<vmem>>, vector<16x48xf32>
    %cst_12 = arith.constant dense<0.000000e+00> : vector<16x8xf32>
    %14 = tpu.matmul %13, %12, %cst_12 {dimension_numbers = #tpu.dot_dimension_numbers<[1], [0], [0], [1], [0, 0, 1, 1], [], []>} : vector<16x48xf32>, vector<48x8xf32>, vector<16x8xf32> -> vector<16x8xf32>
    %c0_13 = arith.constant 0 : index
    %c0_14 = arith.constant 0 : index
    %15 = vector.load %arg7[%c0_13, %c0_14] : memref<16x1xf32, #tpu.memory_space<vmem>>, vector<16x1xf32>
    %16 = vector.broadcast %15 : vector<16x1xf32> to vector<16x8xf32>
    %17 = arith.addf %14, %16 : vector<16x8xf32>
    %c0_15 = arith.constant 0 : index
    %c0_16 = arith.constant 0 : index
    %18 = vector.load %arg8[%c0_15, %c0_16] : memref<16x8xf32, #tpu.memory_space<vmem>>, vector<16x8xf32>
    tpu.vector_store %arg8[%c0_15, %c0_16], %17 {strides = array<i32>} : memref<16x8xf32, #tpu.memory_space<vmem>>, vector<16x8xf32>,
    return
  }
  func.func @transform_0(%arg0: i32) -> (i32, i32) {
    %c0_i32 = arith.constant 0 : i32
    %c0_i32_0 = arith.constant 0 : i32
    return %c0_i32, %arg0 : i32, i32
  }
  func.func @transform_1(%arg0: i32) -> (i32, i32) {
    %c0_i32 = arith.constant 0 : i32
    %c0_i32_0 = arith.constant 0 : i32
    %c0_i32_1 = arith.constant 0 : i32
    return %c0_i32, %c0_i32_0 : i32, i32
  }
  func.func @transform_2(%arg0: i32) -> (i32, i32) {
    %c0_i32 = arith.constant 0 : i32
    %c0_i32_0 = arith.constant 0 : i32
    %c0_i32_1 = arith.constant 0 : i32
    return %c0_i32, %c0_i32_0 : i32, i32
  }
  func.func @transform_3(%arg0: i32) -> (i32, i32) {
    %c0_i32 = arith.constant 0 : i32
    %c0_i32_0 = arith.constant 0 : i32
    %c0_i32_1 = arith.constant 0 : i32
    return %c0_i32, %c0_i32_0 : i32, i32
  }
  func.func @transform_4(%arg0: i32) -> (i32, i32) {
    %c0_i32 = arith.constant 0 : i32
    %c0_i32_0 = arith.constant 0 : i32
    %c0_i32_1 = arith.constant 0 : i32
    return %c0_i32, %c0_i32_0 : i32, i32
  }
  func.func @transform_5(%arg0: i32) -> (i32, i32) {
    %c0_i32 = arith.constant 0 : i32
    %c0_i32_0 = arith.constant 0 : i32
    %c0_i32_1 = arith.constant 0 : i32
    return %c0_i32, %c0_i32_0 : i32, i32
  }
  func.func @transform_6(%arg0: i32) -> (i32, i32) {
    %c0_i32 = arith.constant 0 : i32
    %c0_i32_0 = arith.constant 0 : i32
    %c0_i32_1 = arith.constant 0 : i32
    return %c0_i32, %c0_i32_0 : i32, i32
  }
  func.func @transform_7(%arg0: i32) -> (i32, i32) {
    %c0_i32 = arith.constant 0 : i32
    %c0_i32_0 = arith.constant 0 : i32
    return %c0_i32, %arg0 : i32, i32
  }
}

</mosaic_0001>

<llo_original>
// kernel: tpu_custom_call.1
$region0: #{tpu_custom_call.1}
  #allocation0 [shape = 'u32[]', space=smem, size = 0x4, offset = 0x4, fixed_abs, tag = 'smem constant byte address 0x4 - core index']
  #allocation1 [shape = 'u32[72,128]{1,0:T(1,128)}', space=vmem, size = 0x9000, scoped, tag = 'internal scratch']
  %s0 = inlined_call_operand.vmem [shape: f32[32,8], index: 0, kind: input, shape index: {}]
  %s1 = inlined_call_operand.vmem [shape: f32[64,32], index: 1, kind: input, shape index: {}]
  %s2 = inlined_call_operand.vmem [shape: f32[64,1], index: 2, kind: input, shape index: {}]
  %s3 = inlined_call_operand.vmem [shape: f32[48,64], index: 3, kind: input, shape index: {}]
  %s4 = inlined_call_operand.vmem [shape: f32[48,1], index: 4, kind: input, shape index: {}]
  %s5 = inlined_call_operand.vmem [shape: f32[16,48], index: 5, kind: input, shape index: {}]
  %s6 = inlined_call_operand.vmem [shape: f32[16,1], index: 6, kind: input, shape index: {}]
  %s7 = inlined_call_operand.vmem [shape: f32[16,8], index: 7, kind: output, shape index: {}]
  %s8 = sld [smem:[#allocation0]]
  $region38: #{tpu_custom_call.1} parent=0
    _
  %s10 = ssub.s32 1, %s8
  %s11 = scalar_select 0, %s10, %s8
  // Predicated region
  $region2: #{tpu_custom_call.1} parent=0 // pred_check
    _
  $region3: #{tpu_custom_call.1} parent=0 // pred_check_branch
    %13 = sbr.rel (0) target = $region5
  $region4: #{tpu_custom_call.1} parent=0 // pred_region
    _
  $region5: #{tpu_custom_call.1} parent=0 // pred_fallthru
    _
  // Predicated region
  $region6: #{tpu_custom_call.1} parent=0 // pred_check
    _
  $region7: #{tpu_custom_call.1} parent=0 // pred_check_branch
    %15 = sbr.rel (0) target = $region9
  $region8: #{tpu_custom_call.1} parent=0 // pred_region
    _
  $region9: #{tpu_custom_call.1} parent=0 // pred_fallthru
    _
  // Predicated region
  $region10: #{tpu_custom_call.1} parent=0 // pred_check
    _
  $region11: #{tpu_custom_call.1} parent=0 // pred_check_branch
    %17 = sbr.rel (0) target = $region13
  $region12: #{tpu_custom_call.1} parent=0 // pred_region
    _
  $region13: #{tpu_custom_call.1} parent=0 // pred_fallthru
    _
  // Predicated region
  $region14: #{tpu_custom_call.1} parent=0 // pred_check
    _
  $region15: #{tpu_custom_call.1} parent=0 // pred_check_branch
    %19 = sbr.rel (0) target = $region17
  $region16: #{tpu_custom_call.1} parent=0 // pred_region
    _
  $region17: #{tpu_custom_call.1} parent=0 // pred_fallthru
    _
  // Predicated region
  $region18: #{tpu_custom_call.1} parent=0 // pred_check
    _
  $region19: #{tpu_custom_call.1} parent=0 // pred_check_branch
    %21 = sbr.rel (0) target = $region21
  $region20: #{tpu_custom_call.1} parent=0 // pred_region
    _
  $region21: #{tpu_custom_call.1} parent=0 // pred_fallthru
    _
  // Predicated region
  $region22: #{tpu_custom_call.1} parent=0 // pred_check
    _
  $region23: #{tpu_custom_call.1} parent=0 // pred_check_branch
    %23 = sbr.rel (0) target = $region25
  $region24: #{tpu_custom_call.1} parent=0 // pred_region
    _
  $region25: #{tpu_custom_call.1} parent=0 // pred_fallthru
    _
  // Predicated region
  $region26: #{tpu_custom_call.1} parent=0 // pred_check
    _
  $region27: #{tpu_custom_call.1} parent=0 // pred_check_branch
    %25 = sbr.rel (0) target = $region29
  $region28: #{tpu_custom_call.1} parent=0 // pred_region
    _
  $region29: #{tpu_custom_call.1} parent=0 // pred_fallthru
    _
  %v26 = vld [vmem:[%s0] sm:$0xff]
  %v27 = vld [vmem:[%s0 + $0x8] sm:$0xff]
  %v28 = vld [vmem:[%s0 + $0x10] sm:$0xff]
  %v29 = vld [vmem:[%s0 + $0x18] sm:$0xff]
  %v30 = vld [vmem:[%s1] sm:$0xff]
  %v31 = vld [vmem:[%s1 + $0x8] sm:$0xff]
  %v32 = vld [vmem:[%s1 + $0x10] sm:$0xff]
  %v33 = vld [vmem:[%s1 + $0x18] sm:$0xff]
  %v34 = vld [vmem:[%s1 + $0x20] sm:$0xff]
  %v35 = vld [vmem:[%s1 + $0x28] sm:$0xff]
  %v36 = vld [vmem:[%s1 + $0x30] sm:$0xff]
  %v37 = vld [vmem:[%s1 + $0x38] sm:$0xff]
  %v38 = vld [vmem:[%s2] sm:$0xff]
  %v39 = vld [vmem:[%s2 + $0x8] sm:$0xff]
  %v40 = vld [vmem:[%s2 + $0x10] sm:$0xff]
  %v41 = vld [vmem:[%s2 + $0x18] sm:$0xff]
  %v42 = vld [vmem:[%s2 + $0x20] sm:$0xff]
  %v43 = vld [vmem:[%s2 + $0x28] sm:$0xff]
  %v44 = vld [vmem:[%s2 + $0x30] sm:$0xff]
  %v45 = vld [vmem:[%s2 + $0x38] sm:$0xff]
  %47 = vset.pattern.permute.xlu0 0
  %48 = vperm.xlu0 %47, %v38
  %v49 = vpop.permute.xlu0 %48
  %52 = vset.pattern.permute.xlu0 0
  %53 = vperm.xlu0 %52, %v39
  %v54 = vpop.permute.xlu0 %53
  %57 = vset.pattern.permute.xlu0 0
  %58 = vperm.xlu0 %57, %v40
  %v59 = vpop.permute.xlu0 %58
  %62 = vset.pattern.permute.xlu0 0
  %63 = vperm.xlu0 %62, %v41
  %v64 = vpop.permute.xlu0 %63
  %67 = vset.pattern.permute.xlu0 0
  %68 = vperm.xlu0 %67, %v42
  %v69 = vpop.permute.xlu0 %68
  %72 = vset.pattern.permute.xlu0 0
  %73 = vperm.xlu0 %72, %v43
  %v74 = vpop.permute.xlu0 %73
  %77 = vset.pattern.permute.xlu0 0
  %78 = vperm.xlu0 %77, %v44
  %v79 = vpop.permute.xlu0 %78
  %82 = vset.pattern.permute.xlu0 0
  %83 = vperm.xlu0 %82, %v45
  %v84 = vpop.permute.xlu0 %83
  %vm86 = vcmask 261120
  %v88 = vsel %vm86, %v30, 0
  %v91 = vsel %vm86, %v31, 0
  %v94 = vsel %vm86, %v32, 0
  %v97 = vsel %vm86, %v33, 0
  %v100 = vsel %vm86, %v34, 0
  %v103 = vsel %vm86, %v35, 0
  %v106 = vsel %vm86, %v36, 0
  %v109 = vsel %vm86, %v37, 0
  %111 = vmatpush.msra.mxu0 0.0
  %112 = vmatpush.msra.mxu0 0.0
  %113 = vmatpush.msra.mxu0 0.0
  %114 = vmatpush.msra.mxu0 0.0
  %115 = vmatpush.msra.mxu0 0.0
  %116 = vmatpush.msra.mxu0 0.0
  %117 = vmatpush.msra.mxu0 0.0
  %118 = vmatpush.msra.mxu0 0.0
  %119 = vmatpush.msra.mxu0 0.0
  %120 = vmatpush.msra.mxu0 0.0
  %121 = vmatpush.msra.mxu0 0.0
  %122 = vmatpush.msra.mxu0 0.0
  %123 = vmatpush.msra.mxu0 %v29
  %124 = vmatpush.msra.mxu0 %v28
  %125 = vmatpush.msra.mxu0 %v27
  %126 = vmatpush.msra.mxu0 %v26
  %127 = vmatmul.f32.gmra.mxu0 %v88
  %v128 = vpop.f32.mrf.mxu0
  %v129 = vadd.f32 %v49, %v128
  %130 = vmatmul.f32.gmra.mxu0 %v91
  %v131 = vpop.f32.mrf.mxu0
  %v132 = vadd.f32 %v54, %v131
  %133 = vmatmul.f32.gmra.mxu0 %v94
  %v134 = vpop.f32.mrf.mxu0
  %v135 = vadd.f32 %v59, %v134
  %136 = vmatmul.f32.gmra.mxu0 %v97
  %v137 = vpop.f32.mrf.mxu0
  %v138 = vadd.f32 %v64, %v137
  %139 = vmatmul.f32.gmra.mxu0 %v100
  %v140 = vpop.f32.mrf.mxu0
  %v141 = vadd.f32 %v69, %v140
  %142 = vmatmul.f32.gmra.mxu0 %v103
  %v143 = vpop.f32.mrf.mxu0
  %v144 = vadd.f32 %v74, %v143
  %145 = vmatmul.f32.gmra.mxu0 %v106
  %v146 = vpop.f32.mrf.mxu0
  %v147 = vadd.f32 %v79, %v146
  %148 = vmatmul.f32.gmra.mxu0 %v109
  %v149 = vpop.f32.mrf.mxu0
  %v150 = vadd.f32 %v84, %v149
  %151 = vdwg.mxu0
  %v152 = vtanh.pop %v129
  %v153 = vtanh.pop %v132
  %v154 = vtanh.pop %v135
  %v155 = vtanh.pop %v138
  %v156 = vtanh.pop %v141
  %v157 = vtanh.pop %v144
  %v158 = vtanh.pop %v147
  %v159 = vtanh.pop %v150
  %v160 = vld [vmem:[%s3] sm:$0xff]
  %v161 = vld [vmem:[%s3 + $0x8] sm:$0xff]
  %v162 = vld [vmem:[%s3 + $0x10] sm:$0xff]
  %v163 = vld [vmem:[%s3 + $0x18] sm:$0xff]
  %v164 = vld [vmem:[%s3 + $0x20] sm:$0xff]
  %v165 = vld [vmem:[%s3 + $0x28] sm:$0xff]
  %v166 = vld [vmem:[%s4] sm:$0xff]
  %v167 = vld [vmem:[%s4 + $0x8] sm:$0xff]
  %v168 = vld [vmem:[%s4 + $0x10] sm:$0xff]
  %v169 = vld [vmem:[%s4 + $0x18] sm:$0xff]
  %v170 = vld [vmem:[%s4 + $0x20] sm:$0xff]
  %v171 = vld [vmem:[%s4 + $0x28] sm:$0xff]
  %173 = vset.pattern.permute.xlu0 0
  %174 = vperm.xlu0 %173, %v166
  %v175 = vpop.permute.xlu0 %174
  %178 = vset.pattern.permute.xlu0 0
  %179 = vperm.xlu0 %178, %v167
  %v180 = vpop.permute.xlu0 %179
  %183 = vset.pattern.permute.xlu0 0
  %184 = vperm.xlu0 %183, %v168
  %v185 = vpop.permute.xlu0 %184
  %188 = vset.pattern.permute.xlu0 0
  %189 = vperm.xlu0 %188, %v169
  %v190 = vpop.permute.xlu0 %189
  %193 = vset.pattern.permute.xlu0 0
  %194 = vperm.xlu0 %193, %v170
  %v195 = vpop.permute.xlu0 %194
  %198 = vset.pattern.permute.xlu0 0
  %199 = vperm.xlu0 %198, %v171
  %v200 = vpop.permute.xlu0 %199
  %vm202 = vcmask 523264
  %v204 = vsel %vm202, %v160, 0
  %v207 = vsel %vm202, %v161, 0
  %v210 = vsel %vm202, %v162, 0
  %v213 = vsel %vm202, %v163, 0
  %v216 = vsel %vm202, %v164, 0
  %v219 = vsel %vm202, %v165, 0
  %221 = vmatpush.msra.mxu0 0.0
  %222 = vmatpush.msra.mxu0 0.0
  %223 = vmatpush.msra.mxu0 0.0
  %224 = vmatpush.msra.mxu0 0.0
  %225 = vmatpush.msra.mxu0 0.0
  %226 = vmatpush.msra.mxu0 0.0
  %227 = vmatpush.msra.mxu0 0.0
  %228 = vmatpush.msra.mxu0 0.0
  %229 = vmatpush.msra.mxu0 %v159
  %230 = vmatpush.msra.mxu0 %v158
  %231 = vmatpush.msra.mxu0 %v157
  %232 = vmatpush.msra.mxu0 %v156
  %233 = vmatpush.msra.mxu0 %v155
  %234 = vmatpush.msra.mxu0 %v154
  %235 = vmatpush.msra.mxu0 %v153
  %236 = vmatpush.msra.mxu0 %v152
  %237 = vmatmul.f32.gmra.mxu0 %v204
  %v238 = vpop.f32.mrf.mxu0
  %v239 = vadd.f32 %v175, %v238
  %240 = vmatmul.f32.gmra.mxu0 %v207
  %v241 = vpop.f32.mrf.mxu0
  %v242 = vadd.f32 %v180, %v241
  %243 = vmatmul.f32.gmra.mxu0 %v210
  %v244 = vpop.f32.mrf.mxu0
  %v245 = vadd.f32 %v185, %v244
  %246 = vmatmul.f32.gmra.mxu0 %v213
  %v247 = vpop.f32.mrf.mxu0
  %v248 = vadd.f32 %v190, %v247
  %249 = vmatmul.f32.gmra.mxu0 %v216
  %v250 = vpop.f32.mrf.mxu0
  %v251 = vadd.f32 %v195, %v250
  %252 = vmatmul.f32.gmra.mxu0 %v219
  %v253 = vpop.f32.mrf.mxu0
  %v254 = vadd.f32 %v200, %v253
  %255 = vdwg.mxu0
  %v256 = vtanh.pop %v239
  %v257 = vtanh.pop %v242
  %v258 = vtanh.pop %v245
  %v259 = vtanh.pop %v248
  %v260 = vtanh.pop %v251
  %v261 = vtanh.pop %v254
  %v262 = vld [vmem:[%s5] sm:$0xff]
  %v263 = vld [vmem:[%s5 + $0x8] sm:$0xff]
  %v264 = vld [vmem:[%s6] sm:$0xff]
  %v265 = vld [vmem:[%s6 + $0x8] sm:$0xff]
  %267 = vset.pattern.permute.xlu0 0
  %268 = vperm.xlu0 %267, %v264
  %v269 = vpop.permute.xlu0 %268
  %272 = vset.pattern.permute.xlu0 0
  %273 = vperm.xlu0 %272, %v265
  %v274 = vpop.permute.xlu0 %273
  %vm276 = vcmask 392192
  %v278 = vsel %vm276, %v262, 0
  %v281 = vsel %vm276, %v263, 0
  %283 = vmatpush.msra.mxu0 0.0
  %284 = vmatpush.msra.mxu0 0.0
  %285 = vmatpush.msra.mxu0 0.0
  %286 = vmatpush.msra.mxu0 0.0
  %287 = vmatpush.msra.mxu0 0.0
  %288 = vmatpush.msra.mxu0 0.0
  %289 = vmatpush.msra.mxu0 0.0
  %290 = vmatpush.msra.mxu0 0.0
  %291 = vmatpush.msra.mxu0 0.0
  %292 = vmatpush.msra.mxu0 0.0
  %293 = vmatpush.msra.mxu0 %v261
  %294 = vmatpush.msra.mxu0 %v260
  %295 = vmatpush.msra.mxu0 %v259
  %296 = vmatpush.msra.mxu0 %v258
  %297 = vmatpush.msra.mxu0 %v257
  %298 = vmatpush.msra.mxu0 %v256
  %299 = vmatmul.f32.gmra.mxu0 %v278
  %v300 = vpop.f32.mrf.mxu0
  %v301 = vadd.f32 %v269, %v300
  %302 = vmatmul.f32.gmra.mxu0 %v281
  %v303 = vpop.f32.mrf.mxu0
  %v304 = vadd.f32 %v274, %v303
  %305 = vdwg.mxu0
  %vm306 = vcmask 64512
  %307 = vst.msk [vmem:[%s7] sm:$0xff] %vm306, %v301
  %308 = vst.msk [vmem:[%s7 + $0x8] sm:$0xff] %vm306, %v304
  // Predicated region
  $region30: #{tpu_custom_call.1} parent=0 // pred_check
    _
  $region31: #{tpu_custom_call.1} parent=0 // pred_check_branch
    %310 = sbr.rel (0) target = $region33
  $region32: #{tpu_custom_call.1} parent=0 // pred_region
    _
  $region33: #{tpu_custom_call.1} parent=0 // pred_fallthru
    _
  // Predicated region
  $region34: #{tpu_custom_call.1} parent=0 // pred_check
    _
  $region35: #{tpu_custom_call.1} parent=0 // pred_check_branch
    %312 = sbr.rel (0) target = $region37
  $region36: #{tpu_custom_call.1} parent=0 // pred_region
    _
  $region37: #{tpu_custom_call.1} parent=0 // pred_fallthru
    _

</llo_original>
